<compile_context>
chip_gen: v5e
topology: v5e:2x2
jax: 0.10.0
libtpu: 0.0.40
codegen_flags: <defaults>
</compile_context>

<pallas_src>
import jax
import jax.numpy as jnp
import numpy as np
from jax.experimental import pallas as pl
from jax.experimental.pallas import tpu as pltpu

# ---- model hyper-parameters (match the PyTorch module defaults) -------------
INPUT_DIM = 8
OUTPUT_DIM = 1
EMBED_DIM = 16
NUM_HEADS = 4
NUM_LAYERS = 2
FF_DIM = EMBED_DIM * 2
LN_EPS = 1e-5
BATCH = 8

# ---------------------------- parameter slab layout ---------------------------
# One (SLAB_ROWS, SLAB_W) f32 array.  Matrices are stored in PyTorch (out, in)
# layout (so W @ h_col is the forward op).  Bias / LayerNorm vectors live in a
# 32-row "vector section": vector k occupies column k (read in-kernel as an
# (len, 1) column and broadcast over the batch lanes).
SLAB_W = FF_DIM                                   # 32: widest matrix / vector
MAT_PER_LAYER = EMBED_DIM + FF_DIM + EMBED_DIM    # attn(16) + ff1(32) + ff2(16)

O_EMB_W = 0                                       # (E, INPUT_DIM)


def O_ATTN_W(l):   # fused (out_proj o V-proj) weight, (E, E)
    return EMBED_DIM + l * MAT_PER_LAYER


def O_FF1_W(l):    # (FF, E)
    return O_ATTN_W(l) + EMBED_DIM


def O_FF2_W(l):    # (E, FF)
    return O_FF1_W(l) + FF_DIM


O_REG_W = EMBED_DIM + NUM_LAYERS * MAT_PER_LAYER  # (1, E)  (LN2 gamma folded)
O_REG_B = O_REG_W + 1                             # scalar at [O_REG_B, 0]
V_SEC = ((O_REG_B + 1 + 7) // 8) * 8              # vector section start (8-aligned)
C_EMB_B = 0


def C_VEC(l, k):
    # k: 0 attn_b, 1 ln1_g, 2 ln1_b, 3 ff1_b, 4 ff2_b, 5 ln2_g, 6 ln2_b
    return 1 + 7 * l + k


SLAB_ROWS = V_SEC + FF_DIM                        # 184 (multiple of 8)


# ---------------------------------- kernel ------------------------------------
def ft_transformer_kernel(x_ref, w_ref, o_ref):
    # x_ref: (INPUT_DIM, TILE_B)   batch on the lane axis
    # w_ref: (SLAB_ROWS, SLAB_W)   VMEM-resident parameter slab
    # o_ref: (1, TILE_B)           lane-dense output row
    E, F, D = EMBED_DIM, FF_DIM, INPUT_DIM

    def mat(r, rows, cols):
        return w_ref[r:r + rows, 0:cols]

    def vec(c, rows):
        # (rows, 1) column -> broadcasts across the TILE_B lanes
        return w_ref[V_SEC:V_SEC + rows, c:c + 1]

    def norm(v):  # LayerNorm (no affine) over the feature (sublane) axis
        mu = jnp.mean(v, axis=0, keepdims=True)
        cen = v - mu
        var = jnp.mean(cen * cen, axis=0, keepdims=True)
        return cen * jax.lax.rsqrt(var + LN_EPS)

    # embedding: (E, D) @ (D, TILE_B) + (E, 1)
    h = jnp.dot(mat(O_EMB_W, E, D), x_ref[...],
                preferred_element_type=jnp.float32) + vec(C_EMB_B, E)

    for l in range(NUM_LAYERS):
        # attention (seq_len == 1): softmax over a single key == 1, so the
        # block is exactly out_proj(V); V-proj/out-proj fused host-side.
        attn = (jnp.dot(mat(O_ATTN_W(l), E, E), h,
                        preferred_element_type=jnp.float32)
                + vec(C_VEC(l, 0), E))
        h = norm(h + attn) * vec(C_VEC(l, 1), E) + vec(C_VEC(l, 2), E)

        # feed-forward (ReLU), post-norm encoder layer
        ff = jnp.maximum(
            jnp.dot(mat(O_FF1_W(l), F, E), h,
                    preferred_element_type=jnp.float32) + vec(C_VEC(l, 3), F),
            0.0)
        ff = (jnp.dot(mat(O_FF2_W(l), E, F), ff,
                      preferred_element_type=jnp.float32)
              + vec(C_VEC(l, 4), E))
        h = norm(h + ff)
        if l < NUM_LAYERS - 1:
            h = h * vec(C_VEC(l, 5), E) + vec(C_VEC(l, 6), E)
        # last layer's LN2 affine is folded into the regressor row/bias.

    # regressor (OUTPUT_DIM == 1): (1, E) @ (E, TILE_B) -> lane-dense (1, TILE_B)
    out = (jnp.dot(mat(O_REG_W, 1, E), h, preferred_element_type=jnp.float32)
           + w_ref[O_REG_B:O_REG_B + 1, 0:1])
    o_ref[...] = out


# --------------------------------- wrapper -------------------------------------
def ft_transformer_pallas(x, slab, tile_b=1024):
    """x: (B, INPUT_DIM) f32, slab: (SLAB_ROWS, SLAB_W) f32 -> (B, OUTPUT_DIM).

    tile_b: batch-lane tile.  Sweep 1024-4096 on v5e/v6e (bigger amortizes the
    ~0.35us/step + MXU weight-load overhead); on v7x prefer a tile that gives
    n_tiles >= 2 so the "parallel" grid axis shards across both TensorCores.
    """
    B = x.shape[0]
    xt = x.T  # (INPUT_DIM, B): batch on the lane axis (tiny one-off relayout)

    if B <= tile_b:
        tile = B                               # single tile; block == full dims
    else:
        tile = ((tile_b + 127) // 128) * 128   # lane tiles must be 128-aligned
    n_tiles = -(-B // tile)                    # ragged tail handled by masking

    out = pl.pallas_call(
        ft_transformer_kernel,
        out_shape=jax.ShapeDtypeStruct((1, B), jnp.float32),
        grid=(n_tiles,),
        in_specs=[
            pl.BlockSpec((INPUT_DIM, tile), lambda i: (0, i)),
            pl.BlockSpec((SLAB_ROWS, SLAB_W), lambda i: (0, 0)),  # VMEM-resident
        ],
        out_specs=pl.BlockSpec((1, tile), lambda i: (0, i)),
        compiler_params=pltpu.CompilerParams(
            dimension_semantics=("parallel",)),
    )(xt, slab)
    return out.reshape(B, OUTPUT_DIM)


# --------------------- deterministic parameter construction ------------------
def _uniform(key, shape, bound):
    return jax.random.uniform(key, shape, jnp.float32, -bound, bound)


def init_raw_params(key):
    """PyTorch-shaped parameters (Linear weights are (out, in))."""
    keys = iter(jax.random.split(key, 64))
    raw = {
        "emb_w": _uniform(next(keys), (EMBED_DIM, INPUT_DIM), 1.0 / jnp.sqrt(INPUT_DIM)),
        "emb_b": _uniform(next(keys), (EMBED_DIM,), 1.0 / jnp.sqrt(INPUT_DIM)),
        "layers": [],
        "reg_w": _uniform(next(keys), (OUTPUT_DIM, EMBED_DIM), 1.0 / jnp.sqrt(EMBED_DIM)),
        "reg_b": _uniform(next(keys), (OUTPUT_DIM,), 1.0 / jnp.sqrt(EMBED_DIM)),
    }
    for _ in range(NUM_LAYERS):
        b = 1.0 / jnp.sqrt(EMBED_DIM)
        bf = 1.0 / jnp.sqrt(FF_DIM)
        raw["layers"].append({
            "in_w": _uniform(next(keys), (3 * EMBED_DIM, EMBED_DIM), b),
            "in_b": _uniform(next(keys), (3 * EMBED_DIM,), b),
            "out_w": _uniform(next(keys), (EMBED_DIM, EMBED_DIM), b),
            "out_b": _uniform(next(keys), (EMBED_DIM,), b),
            "ln1_g": jnp.ones((EMBED_DIM,), jnp.float32),
            "ln1_b": jnp.zeros((EMBED_DIM,), jnp.float32),
            "w1": _uniform(next(keys), (FF_DIM, EMBED_DIM), b),
            "b1": _uniform(next(keys), (FF_DIM,), b),
            "w2": _uniform(next(keys), (EMBED_DIM, FF_DIM), bf),
            "b2": _uniform(next(keys), (EMBED_DIM,), bf),
            "ln2_g": jnp.ones((EMBED_DIM,), jnp.float32),
            "ln2_b": jnp.zeros((EMBED_DIM,), jnp.float32),
        })
    return raw


def raw_to_slab(raw):
    """Pack all parameters (with exact algebraic folds) into one f32 slab."""
    E = EMBED_DIM
    slab = np.zeros((SLAB_ROWS, SLAB_W), np.float32)

    def put_mat(r, a):
        a = np.asarray(a, np.float32)
        slab[r:r + a.shape[0], :a.shape[1]] = a

    def put_col(c, v):
        v = np.asarray(v, np.float32).reshape(-1)
        slab[V_SEC:V_SEC + v.shape[0], c] = v

    put_mat(O_EMB_W, raw["emb_w"])                 # (E, D) PyTorch layout
    put_col(C_EMB_B, raw["emb_b"])

    for l, L in enumerate(raw["layers"]):
        Wv = np.asarray(L["in_w"])[2 * E:]         # (E, E) V projection
        bv = np.asarray(L["in_b"])[2 * E:]
        Wo = np.asarray(L["out_w"])                # (E, E)
        bo = np.asarray(L["out_b"])
        put_mat(O_ATTN_W(l), Wo @ Wv)              # fused out_proj(V)
        put_col(C_VEC(l, 0), Wo @ bv + bo)
        put_col(C_VEC(l, 1), L["ln1_g"])
        put_col(C_VEC(l, 2), L["ln1_b"])
        put_mat(O_FF1_W(l), L["w1"])               # (FF, E)
        put_col(C_VEC(l, 3), L["b1"])
        put_mat(O_FF2_W(l), L["w2"])               # (E, FF)
        put_col(C_VEC(l, 4), L["b2"])
        if l < NUM_LAYERS - 1:
            put_col(C_VEC(l, 5), L["ln2_g"])
            put_col(C_VEC(l, 6), L["ln2_b"])

    # fold last layer's LN2 affine into the regressor (exact rewrite)
    Llast = raw["layers"][-1]
    g2 = np.asarray(Llast["ln2_g"])
    beta2 = np.asarray(Llast["ln2_b"])
    rw = np.asarray(raw["reg_w"])[0]               # (E,)   OUTPUT_DIM == 1
    rb = float(np.asarray(raw["reg_b"])[0])
    put_mat(O_REG_W, (g2 * rw)[None, :])
    slab[O_REG_B, 0] = float(beta2 @ rw) + rb
    return jnp.asarray(slab)


# -------------------------- pure-JAX reference --------------------------------
def ref_forward(x, raw):
    E, H, d = EMBED_DIM, NUM_HEADS, EMBED_DIM // NUM_HEADS

    def ln(h, g, b):
        mu = jnp.mean(h, -1, keepdims=True)
        var = jnp.mean((h - mu) ** 2, -1, keepdims=True)
        return (h - mu) / jnp.sqrt(var + LN_EPS) * g + b

    h = x @ raw["emb_w"].T + raw["emb_b"]
    B = h.shape[0]
    for L in raw["layers"]:
        q = h @ L["in_w"][:E].T + L["in_b"][:E]
        k = h @ L["in_w"][E:2 * E].T + L["in_b"][E:2 * E]
        v = h @ L["in_w"][2 * E:].T + L["in_b"][2 * E:]
        qh, kh, vh = (t.reshape(B, H, d) for t in (q, k, v))
        scores = jnp.sum(qh * kh, -1, keepdims=True) / jnp.sqrt(d)   # (B, H, 1)
        w = jax.nn.softmax(scores, axis=-1)                          # == 1 (seq len 1)
        attn = (w * vh).reshape(B, E) @ L["out_w"].T + L["out_b"]
        h = ln(h + attn, L["ln1_g"], L["ln1_b"])
        ff = jax.nn.relu(h @ L["w1"].T + L["b1"]) @ L["w2"].T + L["b2"]
        h = ln(h + ff, L["ln2_g"], L["ln2_b"])
    return h @ raw["reg_w"].T + raw["reg_b"]


# ------------------------------------ main ------------------------------------
if __name__ == "__main__":
    key = jax.random.PRNGKey(0)
    k_x, k_p = jax.random.split(key)

    raw = init_raw_params(k_p)
    slab = raw_to_slab(raw)

    # small batch (single tile; block == full array dims)
    x = jax.random.normal(k_x, (BATCH, INPUT_DIM), jnp.float32)
    out = jax.block_until_ready(ft_transformer_pallas(x, slab))
    expected = jax.block_until_ready(ref_forward(x, raw))
    assert out.shape == (BATCH, OUTPUT_DIM), out.shape
    assert jnp.all(jnp.isfinite(out))
    assert jnp.allclose(out, expected, rtol=1e-3, atol=1e-3), (out, expected)

    # medium non-multiple batch — still a single tile, no padding pass over x
    xb = jax.random.normal(jax.random.PRNGKey(1), (300, INPUT_DIM), jnp.float32)
    outb = jax.block_until_ready(ft_transformer_pallas(xb, slab))
    expb = jax.block_until_ready(ref_forward(xb, raw))
    assert outb.shape == (300, OUTPUT_DIM), outb.shape
    assert jnp.allclose(outb, expb, rtol=1e-3, atol=1e-3)

    # larger ragged batch — exercises the multi-tile parallel grid with a
    # partial final block (masked reads/writes, no jnp.pad)
    xc = jax.random.normal(jax.random.PRNGKey(2), (2600, INPUT_DIM), jnp.float32)
    outc = jax.block_until_ready(ft_transformer_pallas(xc, slab, tile_b=1024))
    expc = jax.block_until_ready(ref_forward(xc, raw))
    assert outc.shape == (2600, OUTPUT_DIM), outc.shape
    assert jnp.allclose(outc, expc, rtol=1e-3, atol=1e-3)

    # TODO(synk): attention simplification (softmax==1, fused V.out_proj) is exact
    # only for seq_len==1, which is what this module's forward produces; dropout
    # layers are eval-mode identity.
    print("KERNEL_OK")
</pallas_src>

<mosaic_0001>
module attributes {stable_mosaic.version = 11 : i64} {
  func.func @ft_transformer_kernel(%arg0: i32, %arg1: memref<8x8xf32, #tpu.memory_space<vmem>>, %arg2: memref<184x32xf32, #tpu.memory_space<vmem>>, %arg3: memref<1x8xf32, #tpu.memory_space<vmem>>) attributes {dimension_semantics = [#tpu.dimension_semantics<parallel>], iteration_bounds = array<i64: 1>, scalar_prefetch = 0 : i64, scratch_operands = 0 : i64, tpu.core_type = #tpu.core_type<tc>, window_params = [{transform_indices = @transform_0, window_bounds = array<i64: 8, 8>}, {pipeline_mode = #tpu.pipeline_mode<synchronous>, transform_indices = @transform_1, window_bounds = array<i64: 184, 32>}, {transform_indices = @transform_2, window_bounds = array<i64: 1, 8>}]} {
    %c0 = arith.constant 0 : index
    %c0_0 = arith.constant 0 : index
    %0 = vector.load %arg2[%c0, %c0_0] : memref<184x32xf32, #tpu.memory_space<vmem>>, vector<16x8xf32>
    %c0_1 = arith.constant 0 : index
    %c0_2 = arith.constant 0 : index
    %1 = vector.load %arg1[%c0_1, %c0_2] : memref<8x8xf32, #tpu.memory_space<vmem>>, vector<8x8xf32>
    %cst = arith.constant dense<0.000000e+00> : vector<16x8xf32>
    %2 = tpu.matmul %0, %1, %cst {dimension_numbers = #tpu.dot_dimension_numbers<[1], [0], [0], [1], [0, 0, 1, 1], [], []>} : vector<16x8xf32>, vector<8x8xf32>, vector<16x8xf32> -> vector<16x8xf32>
    %c152 = arith.constant 152 : index
    %c0_3 = arith.constant 0 : index
    %3 = vector.load %arg2[%c152, %c0_3] : memref<184x32xf32, #tpu.memory_space<vmem>>, vector<16x1xf32>
    %4 = vector.broadcast %3 : vector<16x1xf32> to vector<16x8xf32>
    %5 = arith.addf %2, %4 : vector<16x8xf32>
    %c16 = arith.constant 16 : index
    %c0_4 = arith.constant 0 : index
    %6 = vector.load %arg2[%c16, %c0_4] : memref<184x32xf32, #tpu.memory_space<vmem>>, vector<16x16xf32>
    %cst_5 = arith.constant dense<0.000000e+00> : vector<16x8xf32>
    %7 = tpu.matmul %6, %5, %cst_5 {dimension_numbers = #tpu.dot_dimension_numbers<[1], [0], [0], [1], [0, 0, 1, 1], [], []>} : vector<16x16xf32>, vector<16x8xf32>, vector<16x8xf32> -> vector<16x8xf32>
    %c152_6 = arith.constant 152 : index
    %c1 = arith.constant 1 : index
    %8 = vector.load %arg2[%c152_6, %c1] : memref<184x32xf32, #tpu.memory_space<vmem>>, vector<16x1xf32>
    %9 = vector.broadcast %8 : vector<16x1xf32> to vector<16x8xf32>
    %10 = arith.addf %7, %9 : vector<16x8xf32>
    %11 = arith.addf %5, %10 : vector<16x8xf32>
    %cst_7 = arith.constant dense<0.000000e+00> : vector<8xf32>
    %12 = vector.multi_reduction <add>, %11, %cst_7 [0] : vector<16x8xf32> to vector<8xf32>
    %13 = vector.shape_cast %12 : vector<8xf32> to vector<1x8xf32>
    %cst_8 = arith.constant 1.600000e+01 : f32
    %14 = vector.broadcast %cst_8 : f32 to vector<1x8xf32>
    %15 = arith.divf %13, %14 : vector<1x8xf32>
    %16 = vector.broadcast %15 : vector<1x8xf32> to vector<16x8xf32>
    %17 = arith.subf %11, %16 : vector<16x8xf32>
    %18 = arith.mulf %17, %17 : vector<16x8xf32>
    %cst_9 = arith.constant dense<0.000000e+00> : vector<8xf32>
    %19 = vector.multi_reduction <add>, %18, %cst_9 [0] : vector<16x8xf32> to vector<8xf32>
    %20 = vector.shape_cast %19 : vector<8xf32> to vector<1x8xf32>
    %cst_10 = arith.constant 1.600000e+01 : f32
    %21 = vector.broadcast %cst_10 : f32 to vector<1x8xf32>
    %22 = arith.divf %20, %21 : vector<1x8xf32>
    %cst_11 = arith.constant 9.99999974E-6 : f32
    %23 = vector.broadcast %cst_11 : f32 to vector<1x8xf32>
    %24 = arith.addf %22, %23 : vector<1x8xf32>
    %25 = math.rsqrt %24 : vector<1x8xf32>
    %26 = vector.broadcast %25 : vector<1x8xf32> to vector<16x8xf32>
    %27 = arith.mulf %17, %26 : vector<16x8xf32>
    %c152_12 = arith.constant 152 : index
    %c2 = arith.constant 2 : index
    %28 = vector.load %arg2[%c152_12, %c2] : memref<184x32xf32, #tpu.memory_space<vmem>>, vector<16x1xf32>
    %29 = vector.broadcast %28 : vector<16x1xf32> to vector<16x8xf32>
    %30 = arith.mulf %27, %29 : vector<16x8xf32>
    %c152_13 = arith.constant 152 : index
    %c3 = arith.constant 3 : index
    %31 = vector.load %arg2[%c152_13, %c3] : memref<184x32xf32, #tpu.memory_space<vmem>>, vector<16x1xf32>
    %32 = vector.broadcast %31 : vector<16x1xf32> to vector<16x8xf32>
    %33 = arith.addf %30, %32 : vector<16x8xf32>
    %c32 = arith.constant 32 : index
    %c0_14 = arith.constant 0 : index
    %34 = vector.load %arg2[%c32, %c0_14] : memref<184x32xf32, #tpu.memory_space<vmem>>, vector<32x16xf32>
    %cst_15 = arith.constant dense<0.000000e+00> : vector<32x8xf32>
    %35 = tpu.matmul %34, %33, %cst_15 {dimension_numbers = #tpu.dot_dimension_numbers<[1], [0], [0], [1], [0, 0, 1, 1], [], []>} : vector<32x16xf32>, vector<16x8xf32>, vector<32x8xf32> -> vector<32x8xf32>
    %c152_16 = arith.constant 152 : index
    %c4 = arith.constant 4 : index
    %36 = vector.load %arg2[%c152_16, %c4] : memref<184x32xf32, #tpu.memory_space<vmem>>, vector<32x1xf32>
    %37 = vector.broadcast %36 : vector<32x1xf32> to vector<32x8xf32>
    %38 = arith.addf %35, %37 : vector<32x8xf32>
    %cst_17 = arith.constant 0.000000e+00 : f32
    %39 = vector.broadcast %cst_17 : f32 to vector<32x8xf32>
    %40 = arith.maximumf %38, %39 : vector<32x8xf32>
    %c64 = arith.constant 64 : index
    %c0_18 = arith.constant 0 : index
    %41 = vector.load %arg2[%c64, %c0_18] : memref<184x32xf32, #tpu.memory_space<vmem>>, vector<16x32xf32>
    %cst_19 = arith.constant dense<0.000000e+00> : vector<16x8xf32>
    %42 = tpu.matmul %41, %40, %cst_19 {dimension_numbers = #tpu.dot_dimension_numbers<[1], [0], [0], [1], [0, 0, 1, 1], [], []>} : vector<16x32xf32>, vector<32x8xf32>, vector<16x8xf32> -> vector<16x8xf32>
    %c152_20 = arith.constant 152 : index
    %c5 = arith.constant 5 : index
    %43 = vector.load %arg2[%c152_20, %c5] : memref<184x32xf32, #tpu.memory_space<vmem>>, vector<16x1xf32>
    %44 = vector.broadcast %43 : vector<16x1xf32> to vector<16x8xf32>
    %45 = arith.addf %42, %44 : vector<16x8xf32>
    %46 = arith.addf %33, %45 : vector<16x8xf32>
    %cst_21 = arith.constant dense<0.000000e+00> : vector<8xf32>
    %47 = vector.multi_reduction <add>, %46, %cst_21 [0] : vector<16x8xf32> to vector<8xf32>
    %48 = vector.shape_cast %47 : vector<8xf32> to vector<1x8xf32>
    %cst_22 = arith.constant 1.600000e+01 : f32
    %49 = vector.broadcast %cst_22 : f32 to vector<1x8xf32>
    %50 = arith.divf %48, %49 : vector<1x8xf32>
    %51 = vector.broadcast %50 : vector<1x8xf32> to vector<16x8xf32>
    %52 = arith.subf %46, %51 : vector<16x8xf32>
    %53 = arith.mulf %52, %52 : vector<16x8xf32>
    %cst_23 = arith.constant dense<0.000000e+00> : vector<8xf32>
    %54 = vector.multi_reduction <add>, %53, %cst_23 [0] : vector<16x8xf32> to vector<8xf32>
    %55 = vector.shape_cast %54 : vector<8xf32> to vector<1x8xf32>
    %cst_24 = arith.constant 1.600000e+01 : f32
    %56 = vector.broadcast %cst_24 : f32 to vector<1x8xf32>
    %57 = arith.divf %55, %56 : vector<1x8xf32>
    %cst_25 = arith.constant 9.99999974E-6 : f32
    %58 = vector.broadcast %cst_25 : f32 to vector<1x8xf32>
    %59 = arith.addf %57, %58 : vector<1x8xf32>
    %60 = math.rsqrt %59 : vector<1x8xf32>
    %61 = vector.broadcast %60 : vector<1x8xf32> to vector<16x8xf32>
    %62 = arith.mulf %52, %61 : vector<16x8xf32>
    %c152_26 = arith.constant 152 : index
    %c6 = arith.constant 6 : index
    %63 = vector.load %arg2[%c152_26, %c6] : memref<184x32xf32, #tpu.memory_space<vmem>>, vector<16x1xf32>
    %64 = vector.broadcast %63 : vector<16x1xf32> to vector<16x8xf32>
    %65 = arith.mulf %62, %64 : vector<16x8xf32>
    %c152_27 = arith.constant 152 : index
    %c7 = arith.constant 7 : index
    %66 = vector.load %arg2[%c152_27, %c7] : memref<184x32xf32, #tpu.memory_space<vmem>>, vector<16x1xf32>
    %67 = vector.broadcast %66 : vector<16x1xf32> to vector<16x8xf32>
    %68 = arith.addf %65, %67 : vector<16x8xf32>
    %c80 = arith.constant 80 : index
    %c0_28 = arith.constant 0 : index
    %69 = vector.load %arg2[%c80, %c0_28] : memref<184x32xf32, #tpu.memory_space<vmem>>, vector<16x16xf32>
    %cst_29 = arith.constant dense<0.000000e+00> : vector<16x8xf32>
    %70 = tpu.matmul %69, %68, %cst_29 {dimension_numbers = #tpu.dot_dimension_numbers<[1], [0], [0], [1], [0, 0, 1, 1], [], []>} : vector<16x16xf32>, vector<16x8xf32>, vector<16x8xf32> -> vector<16x8xf32>
    %c152_30 = arith.constant 152 : index
    %c8 = arith.constant 8 : index
    %71 = vector.load %arg2[%c152_30, %c8] : memref<184x32xf32, #tpu.memory_space<vmem>>, vector<16x1xf32>
    %72 = vector.broadcast %71 : vector<16x1xf32> to vector<16x8xf32>
    %73 = arith.addf %70, %72 : vector<16x8xf32>
    %74 = arith.addf %68, %73 : vector<16x8xf32>
    %cst_31 = arith.constant dense<0.000000e+00> : vector<8xf32>
    %75 = vector.multi_reduction <add>, %74, %cst_31 [0] : vector<16x8xf32> to vector<8xf32>
    %76 = vector.shape_cast %75 : vector<8xf32> to vector<1x8xf32>
    %cst_32 = arith.constant 1.600000e+01 : f32
    %77 = vector.broadcast %cst_32 : f32 to vector<1x8xf32>
    %78 = arith.divf %76, %77 : vector<1x8xf32>
    %79 = vector.broadcast %78 : vector<1x8xf32> to vector<16x8xf32>
    %80 = arith.subf %74, %79 : vector<16x8xf32>
    %81 = arith.mulf %80, %80 : vector<16x8xf32>
    %cst_33 = arith.constant dense<0.000000e+00> : vector<8xf32>
    %82 = vector.multi_reduction <add>, %81, %cst_33 [0] : vector<16x8xf32> to vector<8xf32>
    %83 = vector.shape_cast %82 : vector<8xf32> to vector<1x8xf32>
    %cst_34 = arith.constant 1.600000e+01 : f32
    %84 = vector.broadcast %cst_34 : f32 to vector<1x8xf32>
    %85 = arith.divf %83, %84 : vector<1x8xf32>
    %cst_35 = arith.constant 9.99999974E-6 : f32
    %86 = vector.broadcast %cst_35 : f32 to vector<1x8xf32>
    %87 = arith.addf %85, %86 : vector<1x8xf32>
    %88 = math.rsqrt %87 : vector<1x8xf32>
    %89 = vector.broadcast %88 : vector<1x8xf32> to vector<16x8xf32>
    %90 = arith.mulf %80, %89 : vector<16x8xf32>
    %c152_36 = arith.constant 152 : index
    %c9 = arith.constant 9 : index
    %91 = vector.load %arg2[%c152_36, %c9] : memref<184x32xf32, #tpu.memory_space<vmem>>, vector<16x1xf32>
    %92 = vector.broadcast %91 : vector<16x1xf32> to vector<16x8xf32>
    %93 = arith.mulf %90, %92 : vector<16x8xf32>
    %c152_37 = arith.constant 152 : index
    %c10 = arith.constant 10 : index
    %94 = vector.load %arg2[%c152_37, %c10] : memref<184x32xf32, #tpu.memory_space<vmem>>, vector<16x1xf32>
    %95 = vector.broadcast %94 : vector<16x1xf32> to vector<16x8xf32>
    %96 = arith.addf %93, %95 : vector<16x8xf32>
    %c96 = arith.constant 96 : index
    %c0_38 = arith.constant 0 : index
    %97 = vector.load %arg2[%c96, %c0_38] : memref<184x32xf32, #tpu.memory_space<vmem>>, vector<32x16xf32>
    %cst_39 = arith.constant dense<0.000000e+00> : vector<32x8xf32>
    %98 = tpu.matmul %97, %96, %cst_39 {dimension_numbers = #tpu.dot_dimension_numbers<[1], [0], [0], [1], [0, 0, 1, 1], [], []>} : vector<32x16xf32>, vector<16x8xf32>, vector<32x8xf32> -> vector<32x8xf32>
    %c152_40 = arith.constant 152 : index
    %c11 = arith.constant 11 : index
    %99 = vector.load %arg2[%c152_40, %c11] : memref<184x32xf32, #tpu.memory_space<vmem>>, vector<32x1xf32>
    %100 = vector.broadcast %99 : vector<32x1xf32> to vector<32x8xf32>
    %101 = arith.addf %98, %100 : vector<32x8xf32>
    %cst_41 = arith.constant 0.000000e+00 : f32
    %102 = vector.broadcast %cst_41 : f32 to vector<32x8xf32>
    %103 = arith.maximumf %101, %102 : vector<32x8xf32>
    %c128 = arith.constant 128 : index
    %c0_42 = arith.constant 0 : index
    %104 = vector.load %arg2[%c128, %c0_42] : memref<184x32xf32, #tpu.memory_space<vmem>>, vector<16x32xf32>
    %cst_43 = arith.constant dense<0.000000e+00> : vector<16x8xf32>
    %105 = tpu.matmul %104, %103, %cst_43 {dimension_numbers = #tpu.dot_dimension_numbers<[1], [0], [0], [1], [0, 0, 1, 1], [], []>} : vector<16x32xf32>, vector<32x8xf32>, vector<16x8xf32> -> vector<16x8xf32>
    %c152_44 = arith.constant 152 : index
    %c12 = arith.constant 12 : index
    %106 = vector.load %arg2[%c152_44, %c12] : memref<184x32xf32, #tpu.memory_space<vmem>>, vector<16x1xf32>
    %107 = vector.broadcast %106 : vector<16x1xf32> to vector<16x8xf32>
    %108 = arith.addf %105, %107 : vector<16x8xf32>
    %109 = arith.addf %96, %108 : vector<16x8xf32>
    %cst_45 = arith.constant dense<0.000000e+00> : vector<8xf32>
    %110 = vector.multi_reduction <add>, %109, %cst_45 [0] : vector<16x8xf32> to vector<8xf32>
    %111 = vector.shape_cast %110 : vector<8xf32> to vector<1x8xf32>
    %cst_46 = arith.constant 1.600000e+01 : f32
    %112 = vector.broadcast %cst_46 : f32 to vector<1x8xf32>
    %113 = arith.divf %111, %112 : vector<1x8xf32>
    %114 = vector.broadcast %113 : vector<1x8xf32> to vector<16x8xf32>
    %115 = arith.subf %109, %114 : vector<16x8xf32>
    %116 = arith.mulf %115, %115 : vector<16x8xf32>
    %cst_47 = arith.constant dense<0.000000e+00> : vector<8xf32>
    %117 = vector.multi_reduction <add>, %116, %cst_47 [0] : vector<16x8xf32> to vector<8xf32>
    %118 = vector.shape_cast %117 : vector<8xf32> to vector<1x8xf32>
    %cst_48 = arith.constant 1.600000e+01 : f32
    %119 = vector.broadcast %cst_48 : f32 to vector<1x8xf32>
    %120 = arith.divf %118, %119 : vector<1x8xf32>
    %cst_49 = arith.constant 9.99999974E-6 : f32
    %121 = vector.broadcast %cst_49 : f32 to vector<1x8xf32>
    %122 = arith.addf %120, %121 : vector<1x8xf32>
    %123 = math.rsqrt %122 : vector<1x8xf32>
    %124 = vector.broadcast %123 : vector<1x8xf32> to vector<16x8xf32>
    %125 = arith.mulf %115, %124 : vector<16x8xf32>
    %c144 = arith.constant 144 : index
    %c0_50 = arith.constant 0 : index
    %126 = vector.load %arg2[%c144, %c0_50] : memref<184x32xf32, #tpu.memory_space<vmem>>, vector<1x16xf32>
    %cst_51 = arith.constant dense<0.000000e+00> : vector<1x8xf32>
    %127 = tpu.matmul %126, %125, %cst_51 {dimension_numbers = #tpu.dot_dimension_numbers<[1], [0], [0], [1], [0, 0, 1, 1], [], []>} : vector<1x16xf32>, vector<16x8xf32>, vector<1x8xf32> -> vector<1x8xf32>
    %c145 = arith.constant 145 : index
    %c0_52 = arith.constant 0 : index
    %128 = vector.load %arg2[%c145, %c0_52] : memref<184x32xf32, #tpu.memory_space<vmem>>, vector<1x1xf32>
    %129 = vector.broadcast %128 : vector<1x1xf32> to vector<1x8xf32>
    %130 = arith.addf %127, %129 : vector<1x8xf32>
    %c0_53 = arith.constant 0 : index
    %c0_54 = arith.constant 0 : index
    %131 = vector.load %arg3[%c0_53, %c0_54] : memref<1x8xf32, #tpu.memory_space<vmem>>, vector<1x8xf32>
    tpu.vector_store %arg3[%c0_53, %c0_54], %130 {strides = array<i32>} : memref<1x8xf32, #tpu.memory_space<vmem>>, vector<1x8xf32>,
    return
  }
  func.func @transform_0(%arg0: i32) -> (i32, i32) {
    %c0_i32 = arith.constant 0 : i32
    %c0_i32_0 = arith.constant 0 : i32
    return %c0_i32, %arg0 : i32, i32
  }
  func.func @transform_1(%arg0: i32) -> (i32, i32) {
    %c0_i32 = arith.constant 0 : i32
    %c0_i32_0 = arith.constant 0 : i32
    %c0_i32_1 = arith.constant 0 : i32
    return %c0_i32, %c0_i32_0 : i32, i32
  }
  func.func @transform_2(%arg0: i32) -> (i32, i32) {
    %c0_i32 = arith.constant 0 : i32
    %c0_i32_0 = arith.constant 0 : i32
    return %c0_i32, %arg0 : i32, i32
  }
}

</mosaic_0001>

<llo_original>
// kernel: tpu_custom_call.1
$region0: #{tpu_custom_call.1}
  #allocation0 [shape = 'u32[]', space=smem, size = 0x4, offset = 0x4, fixed_abs, tag = 'smem constant byte address 0x4 - core index']
  #allocation1 [shape = 'u32[72,128]{1,0:T(1,128)}', space=vmem, size = 0x9000, scoped, tag = 'internal scratch']
  %s0 = inlined_call_operand.vmem [shape: f32[8,8], index: 0, kind: input, shape index: {}]
  %s1 = inlined_call_operand.vmem [shape: f32[184,32], index: 1, kind: input, shape index: {}]
  %s2 = inlined_call_operand.hbm [shape: f32[1,8], index: 2, kind: output, shape index: {}]
  %s3 = sld [smem:[#allocation0]]
  $region18: #{tpu_custom_call.1} parent=0
    _
  %s5 = ssub.s32 1, %s3
  %s6 = scalar_select 0, %s5, %s3
  $region1: #{tpu_custom_call.1} parent=0
    #allocation2 [shape = 'u8[512]{0}', space=vmem, size = 0x400, scoped, tag = 'output window, operand 0, single buffered']
    #allocation3 [shape = 's32[1]{0}', space=sflag, size = 0x4, scoped, tag = 'scoped memory for tpu_custom_call.1']
    %7 = vsyncpa [#allocation3], 0
    // Predicated region
    $region2: #{tpu_custom_call.1} parent=1 // pred_check
      _
    $region3: #{tpu_custom_call.1} parent=1 // pred_check_branch
      %9 = sbr.rel (0) target = $region5
    $region4: #{tpu_custom_call.1} parent=1 // pred_region
      _
    $region5: #{tpu_custom_call.1} parent=1 // pred_fallthru
      _
    // Predicated region
    $region6: #{tpu_custom_call.1} parent=1 // pred_check
      _
    $region7: #{tpu_custom_call.1} parent=1 // pred_check_branch
      %11 = sbr.rel (0) target = $region9
    $region8: #{tpu_custom_call.1} parent=1 // pred_region
      _
    $region9: #{tpu_custom_call.1} parent=1 // pred_fallthru
      _
    %v12 = vld [vmem:[%s1] sm:$0xff]
    %v13 = vld [vmem:[%s1 + $0x8] sm:$0xff]
    %v14 = vld [vmem:[%s0] sm:$0xff]
    %v15 = vld [vmem:[%s1 + $0x98] sm:$0xff]
    %v16 = vld [vmem:[%s1 + $0xa0] sm:$0xff]
    %18 = vset.pattern.permute.xlu0 0
    %19 = vperm.xlu0 %18, %v15
    %v20 = vpop.permute.xlu0 %19
    %23 = vset.pattern.permute.xlu0 0
    %24 = vperm.xlu0 %23, %v16
    %v25 = vpop.permute.xlu0 %24
    %vm27 = vcmask 64512
    %v29 = vsel %vm27, %v12, 0
    %v32 = vsel %vm27, %v13, 0
    %34 = vmatpush.msra.mxu0 0.0
    %35 = vmatpush.msra.mxu0 0.0
    %36 = vmatpush.msra.mxu0 0.0
    %37 = vmatpush.msra.mxu0 0.0
    %38 = vmatpush.msra.mxu0 0.0
    %39 = vmatpush.msra.mxu0 0.0
    %40 = vmatpush.msra.mxu0 0.0
    %41 = vmatpush.msra.mxu0 0.0
    %42 = vmatpush.msra.mxu0 0.0
    %43 = vmatpush.msra.mxu0 0.0
    %44 = vmatpush.msra.mxu0 0.0
    %45 = vmatpush.msra.mxu0 0.0
    %46 = vmatpush.msra.mxu0 0.0
    %47 = vmatpush.msra.mxu0 0.0
    %48 = vmatpush.msra.mxu0 0.0
    %49 = vmatpush.msra.mxu0 %v14
    %50 = vmatmul.f32.gmra.mxu0 %v29
    %v51 = vpop.f32.mrf.mxu0
    %v52 = vadd.f32 %v20, %v51
    %53 = vmatmul.f32.gmra.mxu0 %v32
    %v54 = vpop.f32.mrf.mxu0
    %v55 = vadd.f32 %v25, %v54
    %56 = vdwg.mxu0
    %v57 = vld [vmem:[%s1 + $0x10] sm:$0xff]
    %v58 = vld [vmem:[%s1 + $0x18] sm:$0xff]
    %59 = vset.pattern.permute.xlu0 1
    %60 = vperm.xlu0 %59, %v15
    %v61 = vpop.permute.xlu0 %60
    %63 = vset.pattern.permute.xlu0 1
    %64 = vperm.xlu0 %63, %v16
    %v65 = vpop.permute.xlu0 %64
    %vm67 = vcmask 130048
    %v69 = vsel %vm67, %v57, 0
    %v72 = vsel %vm67, %v58, 0
    %74 = vmatpush.msra.mxu0 0.0
    %75 = vmatpush.msra.mxu0 0.0
    %76 = vmatpush.msra.mxu0 0.0
    %77 = vmatpush.msra.mxu0 0.0
    %78 = vmatpush.msra.mxu0 0.0
    %79 = vmatpush.msra.mxu0 0.0
    %80 = vmatpush.msra.mxu0 0.0
    %81 = vmatpush.msra.mxu0 0.0
    %82 = vmatpush.msra.mxu0 0.0
    %83 = vmatpush.msra.mxu0 0.0
    %84 = vmatpush.msra.mxu0 0.0
    %85 = vmatpush.msra.mxu0 0.0
    %86 = vmatpush.msra.mxu0 0.0
    %87 = vmatpush.msra.mxu0 0.0
    %88 = vmatpush.msra.mxu0 %v55
    %89 = vmatpush.msra.mxu0 %v52
    %90 = vmatmul.f32.gmra.mxu0 %v69
    %v91 = vpop.f32.mrf.mxu0
    %v92 = vadd.f32 %v61, %v91
    %93 = vmatmul.f32.gmra.mxu0 %v72
    %v94 = vpop.f32.mrf.mxu0
    %v95 = vadd.f32 %v65, %v94
    %96 = vdwg.mxu0
    %v97 = vadd.f32 %v52, %v92
    %v98 = vadd.f32 %v55, %v95
    %v99 = vsel %vm27, %v97, 0.0
    %v100 = vsel %vm27, %v98, 0.0
    %v101 = vadd.f32 %v99, %v100
    %v102 = vrot.slane %v101, 4
    %v103 = vadd.f32 %v101, %v102
    %v104 = vrot.slane %v103, 2
    %v105 = vadd.f32 %v103, %v104
    %v106 = vrot.slane %v105, 1
    %v107 = vadd.f32 %v105, %v106
    %v108 = vrcp.pop 16.0
    %v109 = vmul.f32 16.0, %v108
    %v110 = vsub.f32 1.0, %v109
    %v111 = vmul.f32 %v108, %v110
    %v112 = vadd.f32 %v108, %v111
    %vm113 = vweird.f32 %v108
    %v114 = vsel %vm113, %v108, %v112
    %v115 = vmul.f32 %v107, %v114
    %v116 = vsub.f32 %v97, %v115
    %v117 = vsub.f32 %v98, %v115
    %v118 = vmul.f32 %v116, %v116
    %v119 = vmul.f32 %v117, %v117
    %v120 = vsel %vm27, %v118, 0.0
    %v121 = vsel %vm27, %v119, 0.0
    %v122 = vadd.f32 %v120, %v121
    %v123 = vrot.slane %v122, 4
    %v124 = vadd.f32 %v122, %v123
    %v125 = vrot.slane %v124, 2
    %v126 = vadd.f32 %v124, %v125
    %v127 = vrot.slane %v126, 1
    %v128 = vadd.f32 %v126, %v127
    %v129 = vmul.f32 %v128, %v114
    %v130 = vadd.f32 %v129, 1e-05
    %v131 = vrsqrt.pop %v130
    %v132 = vmul.f32 %v131, %v130
    %v133 = vmul.f32 %v132, %v131
    %v134 = vmul.f32 0.5, %v133
    %v135 = vsub.f32 1.5, %v134
    %v136 = vmul.f32 %v131, %v135
    %vm137 = vweird.f32 %v130
    %vm138 = vweird.f32 %v131
    %vm139 = vmor %vm137, %vm138
    %v140 = vsel %vm139, %v131, %v136
    %v141 = vmul.f32 %v116, %v140
    %v142 = vmul.f32 %v117, %v140
    %143 = vset.pattern.permute.xlu0 2
    %144 = vperm.xlu0 %143, %v15
    %v145 = vpop.permute.xlu0 %144
    %147 = vset.pattern.permute.xlu0 2
    %148 = vperm.xlu0 %147, %v16
    %v149 = vpop.permute.xlu0 %148
    %v151 = vmul.f32 %v141, %v145
    %v152 = vmul.f32 %v142, %v149
    %153 = vset.pattern.permute.xlu0 3
    %154 = vperm.xlu0 %153, %v15
    %v155 = vpop.permute.xlu0 %154
    %157 = vset.pattern.permute.xlu0 3
    %158 = vperm.xlu0 %157, %v16
    %v159 = vpop.permute.xlu0 %158
    %v161 = vadd.f32 %v151, %v155
    %v162 = vadd.f32 %v152, %v159
    %v163 = vld [vmem:[%s1 + $0x20] sm:$0xff]
    %v164 = vld [vmem:[%s1 + $0x28] sm:$0xff]
    %v165 = vld [vmem:[%s1 + $0x30] sm:$0xff]
    %v166 = vld [vmem:[%s1 + $0x38] sm:$0xff]
    %v167 = vld [vmem:[%s1 + $0x98] sm:$0xff]
    %v168 = vld [vmem:[%s1 + $0xa0] sm:$0xff]
    %v169 = vld [vmem:[%s1 + $0xa8] sm:$0xff]
    %v170 = vld [vmem:[%s1 + $0xb0] sm:$0xff]
    %172 = vset.pattern.permute.xlu0 4
    %173 = vperm.xlu0 %172, %v167
    %v174 = vpop.permute.xlu0 %173
    %177 = vset.pattern.permute.xlu0 4
    %178 = vperm.xlu0 %177, %v168
    %v179 = vpop.permute.xlu0 %178
    %182 = vset.pattern.permute.xlu0 4
    %183 = vperm.xlu0 %182, %v169
    %v184 = vpop.permute.xlu0 %183
    %187 = vset.pattern.permute.xlu0 4
    %188 = vperm.xlu0 %187, %v170
    %v189 = vpop.permute.xlu0 %188
    %v192 = vsel %vm67, %v163, 0
    %v195 = vsel %vm67, %v164, 0
    %v198 = vsel %vm67, %v165, 0
    %v201 = vsel %vm67, %v166, 0
    %203 = vmatpush.msra.mxu0 0.0
    %204 = vmatpush.msra.mxu0 0.0
    %205 = vmatpush.msra.mxu0 0.0
    %206 = vmatpush.msra.mxu0 0.0
    %207 = vmatpush.msra.mxu0 0.0
    %208 = vmatpush.msra.mxu0 0.0
    %209 = vmatpush.msra.mxu0 0.0
    %210 = vmatpush.msra.mxu0 0.0
    %211 = vmatpush.msra.mxu0 0.0
    %212 = vmatpush.msra.mxu0 0.0
    %213 = vmatpush.msra.mxu0 0.0
    %214 = vmatpush.msra.mxu0 0.0
    %215 = vmatpush.msra.mxu0 0.0
    %216 = vmatpush.msra.mxu0 0.0
    %217 = vmatpush.msra.mxu0 %v162
    %218 = vmatpush.msra.mxu0 %v161
    %219 = vmatmul.f32.gmra.mxu0 %v192
    %v220 = vpop.f32.mrf.mxu0
    %v221 = vadd.f32 %v174, %v220
    %222 = vmatmul.f32.gmra.mxu0 %v195
    %v223 = vpop.f32.mrf.mxu0
    %v224 = vadd.f32 %v179, %v223
    %225 = vmatmul.f32.gmra.mxu0 %v198
    %v226 = vpop.f32.mrf.mxu0
    %v227 = vadd.f32 %v184, %v226
    %228 = vmatmul.f32.gmra.mxu0 %v201
    %v229 = vpop.f32.mrf.mxu0
    %v230 = vadd.f32 %v189, %v229
    %231 = vdwg.mxu0
    %v232 = vmax.f32 %v221, 0.0
    %v233 = vmax.f32 %v224, 0.0
    %v234 = vmax.f32 %v227, 0.0
    %v235 = vmax.f32 %v230, 0.0
    %v236 = vld [vmem:[%s1 + $0x40] sm:$0xff]
    %v237 = vld [vmem:[%s1 + $0x48] sm:$0xff]
    %238 = vset.pattern.permute.xlu0 5
    %239 = vperm.xlu0 %238, %v15
    %v240 = vpop.permute.xlu0 %239
    %242 = vset.pattern.permute.xlu0 5
    %243 = vperm.xlu0 %242, %v16
    %v244 = vpop.permute.xlu0 %243
    %vm246 = vcmask 261120
    %v248 = vsel %vm246, %v236, 0
    %v251 = vsel %vm246, %v237, 0
    %253 = vmatpush.msra.mxu0 0.0
    %254 = vmatpush.msra.mxu0 0.0
    %255 = vmatpush.msra.mxu0 0.0
    %256 = vmatpush.msra.mxu0 0.0
    %257 = vmatpush.msra.mxu0 0.0
    %258 = vmatpush.msra.mxu0 0.0
    %259 = vmatpush.msra.mxu0 0.0
    %260 = vmatpush.msra.mxu0 0.0
    %261 = vmatpush.msra.mxu0 0.0
    %262 = vmatpush.msra.mxu0 0.0
    %263 = vmatpush.msra.mxu0 0.0
    %264 = vmatpush.msra.mxu0 0.0
    %265 = vmatpush.msra.mxu0 %v235
    %266 = vmatpush.msra.mxu0 %v234
    %267 = vmatpush.msra.mxu0 %v233
    %268 = vmatpush.msra.mxu0 %v232
    %269 = vmatmul.f32.gmra.mxu0 %v248
    %v270 = vpop.f32.mrf.mxu0
    %v271 = vadd.f32 %v240, %v270
    %272 = vmatmul.f32.gmra.mxu0 %v251
    %v273 = vpop.f32.mrf.mxu0
    %v274 = vadd.f32 %v244, %v273
    %275 = vdwg.mxu0
    %v276 = vadd.f32 %v161, %v271
    %v277 = vadd.f32 %v162, %v274
    %v278 = vsel %vm27, %v276, 0.0
    %v279 = vsel %vm27, %v277, 0.0
    %v280 = vadd.f32 %v278, %v279
    %v281 = vrot.slane %v280, 4
    %v282 = vadd.f32 %v280, %v281
    %v283 = vrot.slane %v282, 2
    %v284 = vadd.f32 %v282, %v283
    %v285 = vrot.slane %v284, 1
    %v286 = vadd.f32 %v284, %v285
    %v287 = vmul.f32 %v286, %v114
    %v288 = vsub.f32 %v276, %v287
    %v289 = vsub.f32 %v277, %v287
    %v290 = vmul.f32 %v288, %v288
    %v291 = vmul.f32 %v289, %v289
    %v292 = vsel %vm27, %v290, 0.0
    %v293 = vsel %vm27, %v291, 0.0
    %v294 = vadd.f32 %v292, %v293
    %v295 = vrot.slane %v294, 4
    %v296 = vadd.f32 %v294, %v295
    %v297 = vrot.slane %v296, 2
    %v298 = vadd.f32 %v296, %v297
    %v299 = vrot.slane %v298, 1
    %v300 = vadd.f32 %v298, %v299
    %v301 = vmul.f32 %v300, %v114
    %v302 = vadd.f32 %v301, 1e-05
    %v303 = vrsqrt.pop %v302
    %v304 = vmul.f32 %v303, %v302
    %v305 = vmul.f32 %v304, %v303
    %v306 = vmul.f32 0.5, %v305
    %v307 = vsub.f32 1.5, %v306
    %v308 = vmul.f32 %v303, %v307
    %vm309 = vweird.f32 %v302
    %vm310 = vweird.f32 %v303
    %vm311 = vmor %vm309, %vm310
    %v312 = vsel %vm311, %v303, %v308
    %v313 = vmul.f32 %v288, %v312
    %v314 = vmul.f32 %v289, %v312
    %315 = vset.pattern.permute.xlu0 6
    %316 = vperm.xlu0 %315, %v15
    %v317 = vpop.permute.xlu0 %316
    %319 = vset.pattern.permute.xlu0 6
    %320 = vperm.xlu0 %319, %v16
    %v321 = vpop.permute.xlu0 %320
    %v323 = vmul.f32 %v313, %v317
    %v324 = vmul.f32 %v314, %v321
    %325 = vset.pattern.permute.xlu0 7
    %326 = vperm.xlu0 %325, %v15
    %v327 = vpop.permute.xlu0 %326
    %329 = vset.pattern.permute.xlu0 7
    %330 = vperm.xlu0 %329, %v16
    %v331 = vpop.permute.xlu0 %330
    %v333 = vadd.f32 %v323, %v327
    %v334 = vadd.f32 %v324, %v331
    %v335 = vld [vmem:[%s1 + $0x50] sm:$0xff]
    %v336 = vld [vmem:[%s1 + $0x58] sm:$0xff]
    %337 = vset.pattern.permute.xlu0 8
    %338 = vperm.xlu0 %337, %v15
    %v339 = vpop.permute.xlu0 %338
    %341 = vset.pattern.permute.xlu0 8
    %342 = vperm.xlu0 %341, %v16
    %v343 = vpop.permute.xlu0 %342
    %v346 = vsel %vm67, %v335, 0
    %v349 = vsel %vm67, %v336, 0
    %351 = vmatpush.msra.mxu0 0.0
    %352 = vmatpush.msra.mxu0 0.0
    %353 = vmatpush.msra.mxu0 0.0
    %354 = vmatpush.msra.mxu0 0.0
    %355 = vmatpush.msra.mxu0 0.0
    %356 = vmatpush.msra.mxu0 0.0
    %357 = vmatpush.msra.mxu0 0.0
    %358 = vmatpush.msra.mxu0 0.0
    %359 = vmatpush.msra.mxu0 0.0
    %360 = vmatpush.msra.mxu0 0.0
    %361 = vmatpush.msra.mxu0 0.0
    %362 = vmatpush.msra.mxu0 0.0
    %363 = vmatpush.msra.mxu0 0.0
    %364 = vmatpush.msra.mxu0 0.0
    %365 = vmatpush.msra.mxu0 %v334
    %366 = vmatpush.msra.mxu0 %v333
    %367 = vmatmul.f32.gmra.mxu0 %v346
    %v368 = vpop.f32.mrf.mxu0
    %v369 = vadd.f32 %v339, %v368
    %370 = vmatmul.f32.gmra.mxu0 %v349
    %v371 = vpop.f32.mrf.mxu0
    %v372 = vadd.f32 %v343, %v371
    %373 = vdwg.mxu0
    %v374 = vadd.f32 %v333, %v369
    %v375 = vadd.f32 %v334, %v372
    %v376 = vsel %vm27, %v374, 0.0
    %v377 = vsel %vm27, %v375, 0.0
    %v378 = vadd.f32 %v376, %v377
    %v379 = vrot.slane %v378, 4
    %v380 = vadd.f32 %v378, %v379
    %v381 = vrot.slane %v380, 2
    %v382 = vadd.f32 %v380, %v381
    %v383 = vrot.slane %v382, 1
    %v384 = vadd.f32 %v382, %v383
    %v385 = vmul.f32 %v384, %v114
    %v386 = vsub.f32 %v374, %v385
    %v387 = vsub.f32 %v375, %v385
    %v388 = vmul.f32 %v386, %v386
    %v389 = vmul.f32 %v387, %v387
    %v390 = vsel %vm27, %v388, 0.0
    %v391 = vsel %vm27, %v389, 0.0
    %v392 = vadd.f32 %v390, %v391
    %v393 = vrot.slane %v392, 4
    %v394 = vadd.f32 %v392, %v393
    %v395 = vrot.slane %v394, 2
    %v396 = vadd.f32 %v394, %v395
    %v397 = vrot.slane %v396, 1
    %v398 = vadd.f32 %v396, %v397
    %v399 = vmul.f32 %v398, %v114
    %v400 = vadd.f32 %v399, 1e-05
    %v401 = vrsqrt.pop %v400
    %v402 = vmul.f32 %v401, %v400
    %v403 = vmul.f32 %v402, %v401
    %v404 = vmul.f32 0.5, %v403
    %v405 = vsub.f32 1.5, %v404
    %v406 = vmul.f32 %v401, %v405
    %vm407 = vweird.f32 %v400
    %vm408 = vweird.f32 %v401
    %vm409 = vmor %vm407, %vm408
    %v410 = vsel %vm409, %v401, %v406
    %v411 = vmul.f32 %v386, %v410
    %v412 = vmul.f32 %v387, %v410
    %413 = vset.pattern.permute.xlu0 9
    %414 = vperm.xlu0 %413, %v15
    %v415 = vpop.permute.xlu0 %414
    %417 = vset.pattern.permute.xlu0 9
    %418 = vperm.xlu0 %417, %v16
    %v419 = vpop.permute.xlu0 %418
    %v421 = vmul.f32 %v411, %v415
    %v422 = vmul.f32 %v412, %v419
    %423 = vset.pattern.permute.xlu0 10
    %424 = vperm.xlu0 %423, %v15
    %v425 = vpop.permute.xlu0 %424
    %427 = vset.pattern.permute.xlu0 10
    %428 = vperm.xlu0 %427, %v16
    %v429 = vpop.permute.xlu0 %428
    %v431 = vadd.f32 %v421, %v425
    %v432 = vadd.f32 %v422, %v429
    %v433 = vld [vmem:[%s1 + $0x60] sm:$0xff]
    %v434 = vld [vmem:[%s1 + $0x68] sm:$0xff]
    %v435 = vld [vmem:[%s1 + $0x70] sm:$0xff]
    %v436 = vld [vmem:[%s1 + $0x78] sm:$0xff]
    %437 = vset.pattern.permute.xlu0 11
    %438 = vperm.xlu0 %437, %v167
    %v439 = vpop.permute.xlu0 %438
    %441 = vset.pattern.permute.xlu0 11
    %442 = vperm.xlu0 %441, %v168
    %v443 = vpop.permute.xlu0 %442
    %445 = vset.pattern.permute.xlu0 11
    %446 = vperm.xlu0 %445, %v169
    %v447 = vpop.permute.xlu0 %446
    %449 = vset.pattern.permute.xlu0 11
    %450 = vperm.xlu0 %449, %v170
    %v451 = vpop.permute.xlu0 %450
    %v454 = vsel %vm67, %v433, 0
    %v457 = vsel %vm67, %v434, 0
    %v460 = vsel %vm67, %v435, 0
    %v463 = vsel %vm67, %v436, 0
    %465 = vmatpush.msra.mxu0 0.0
    %466 = vmatpush.msra.mxu0 0.0
    %467 = vmatpush.msra.mxu0 0.0
    %468 = vmatpush.msra.mxu0 0.0
    %469 = vmatpush.msra.mxu0 0.0
    %470 = vmatpush.msra.mxu0 0.0
    %471 = vmatpush.msra.mxu0 0.0
    %472 = vmatpush.msra.mxu0 0.0
    %473 = vmatpush.msra.mxu0 0.0
    %474 = vmatpush.msra.mxu0 0.0
    %475 = vmatpush.msra.mxu0 0.0
    %476 = vmatpush.msra.mxu0 0.0
    %477 = vmatpush.msra.mxu0 0.0
    %478 = vmatpush.msra.mxu0 0.0
    %479 = vmatpush.msra.mxu0 %v432
    %480 = vmatpush.msra.mxu0 %v431
    %481 = vmatmul.f32.gmra.mxu0 %v454
    %v482 = vpop.f32.mrf.mxu0
    %v483 = vadd.f32 %v439, %v482
    %484 = vmatmul.f32.gmra.mxu0 %v457
    %v485 = vpop.f32.mrf.mxu0
    %v486 = vadd.f32 %v443, %v485
    %487 = vmatmul.f32.gmra.mxu0 %v460
    %v488 = vpop.f32.mrf.mxu0
    %v489 = vadd.f32 %v447, %v488
    %490 = vmatmul.f32.gmra.mxu0 %v463
    %v491 = vpop.f32.mrf.mxu0
    %v492 = vadd.f32 %v451, %v491
    %493 = vdwg.mxu0
    %v494 = vmax.f32 %v483, 0.0
    %v495 = vmax.f32 %v486, 0.0
    %v496 = vmax.f32 %v489, 0.0
    %v497 = vmax.f32 %v492, 0.0
    %v498 = vld [vmem:[%s1 + $0x80] sm:$0xff]
    %v499 = vld [vmem:[%s1 + $0x88] sm:$0xff]
    %500 = vset.pattern.permute.xlu0 12
    %501 = vperm.xlu0 %500, %v15
    %v502 = vpop.permute.xlu0 %501
    %504 = vset.pattern.permute.xlu0 12
    %505 = vperm.xlu0 %504, %v16
    %v506 = vpop.permute.xlu0 %505
    %v509 = vsel %vm246, %v498, 0
    %v512 = vsel %vm246, %v499, 0
    %514 = vmatpush.msra.mxu0 0.0
    %515 = vmatpush.msra.mxu0 0.0
    %516 = vmatpush.msra.mxu0 0.0
    %517 = vmatpush.msra.mxu0 0.0
    %518 = vmatpush.msra.mxu0 0.0
    %519 = vmatpush.msra.mxu0 0.0
    %520 = vmatpush.msra.mxu0 0.0
    %521 = vmatpush.msra.mxu0 0.0
    %522 = vmatpush.msra.mxu0 0.0
    %523 = vmatpush.msra.mxu0 0.0
    %524 = vmatpush.msra.mxu0 0.0
    %525 = vmatpush.msra.mxu0 0.0
    %526 = vmatpush.msra.mxu0 %v497
    %527 = vmatpush.msra.mxu0 %v496
    %528 = vmatpush.msra.mxu0 %v495
    %529 = vmatpush.msra.mxu0 %v494
    %530 = vmatmul.f32.gmra.mxu0 %v509
    %v531 = vpop.f32.mrf.mxu0
    %v532 = vadd.f32 %v502, %v531
    %533 = vmatmul.f32.gmra.mxu0 %v512
    %v534 = vpop.f32.mrf.mxu0
    %v535 = vadd.f32 %v506, %v534
    %536 = vdwg.mxu0
    %v537 = vadd.f32 %v431, %v532
    %v538 = vadd.f32 %v432, %v535
    %v539 = vsel %vm27, %v537, 0.0
    %v540 = vsel %vm27, %v538, 0.0
    %v541 = vadd.f32 %v539, %v540
    %v542 = vrot.slane %v541, 4
    %v543 = vadd.f32 %v541, %v542
    %v544 = vrot.slane %v543, 2
    %v545 = vadd.f32 %v543, %v544
    %v546 = vrot.slane %v545, 1
    %v547 = vadd.f32 %v545, %v546
    %v548 = vmul.f32 %v547, %v114
    %v549 = vsub.f32 %v537, %v548
    %v550 = vsub.f32 %v538, %v548
    %v551 = vmul.f32 %v549, %v549
    %v552 = vmul.f32 %v550, %v550
    %v553 = vsel %vm27, %v551, 0.0
    %v554 = vsel %vm27, %v552, 0.0
    %v555 = vadd.f32 %v553, %v554
    %v556 = vrot.slane %v555, 4
    %v557 = vadd.f32 %v555, %v556
    %v558 = vrot.slane %v557, 2
    %v559 = vadd.f32 %v557, %v558
    %v560 = vrot.slane %v559, 1
    %v561 = vadd.f32 %v559, %v560
    %v562 = vmul.f32 %v561, %v114
    %v563 = vadd.f32 %v562, 1e-05
    %v564 = vrsqrt.pop %v563
    %v565 = vmul.f32 %v564, %v563
    %v566 = vmul.f32 %v565, %v564
    %v567 = vmul.f32 0.5, %v566
    %v568 = vsub.f32 1.5, %v567
    %v569 = vmul.f32 %v564, %v568
    %vm570 = vweird.f32 %v563
    %vm571 = vweird.f32 %v564
    %vm572 = vmor %vm570, %vm571
    %v573 = vsel %vm572, %v564, %v569
    %v574 = vmul.f32 %v549, %v573
    %v575 = vmul.f32 %v550, %v573
    %v576 = vld [vmem:[%s1 + $0x90] sm:$0x1]
    %v577 = vld [vmem:[%s1 + $0x91] sm:$0x1]
    %579 = vset.pattern.permute.xlu0 0
    %580 = vperm.xlu0 %579, %v577
    %v581 = vpop.permute.xlu0 %580
    %v584 = vsel %vm67, %v576, 0
    %586 = vmatpush.msra.mxu0 0.0
    %587 = vmatpush.msra.mxu0 0.0
    %588 = vmatpush.msra.mxu0 0.0
    %589 = vmatpush.msra.mxu0 0.0
    %590 = vmatpush.msra.mxu0 0.0
    %591 = vmatpush.msra.mxu0 0.0
    %592 = vmatpush.msra.mxu0 0.0
    %593 = vmatpush.msra.mxu0 0.0
    %594 = vmatpush.msra.mxu0 0.0
    %595 = vmatpush.msra.mxu0 0.0
    %596 = vmatpush.msra.mxu0 0.0
    %597 = vmatpush.msra.mxu0 0.0
    %598 = vmatpush.msra.mxu0 0.0
    %599 = vmatpush.msra.mxu0 0.0
    %600 = vmatpush.msra.mxu0 %v575
    %601 = vmatpush.msra.mxu0 %v574
    %602 = vmatmul.f32.gmra.mxu0 %v584
    %v603 = vpop.f32.mrf.mxu0
    %v604 = vadd.f32 %v581, %v603
    %605 = vdwg.mxu0
    %vm606 = vcmask 57344
    %607 = vst.msk [vmem:[#allocation2] sm:$0x1] %vm606, %v604
    // Predicated region
    $region10: #{tpu_custom_call.1} parent=1 // pred_check
      _
    $region11: #{tpu_custom_call.1} parent=1 // pred_check_branch
      %609 = sbr.rel (0) target = $region13
    $region12: #{tpu_custom_call.1} parent=1 // pred_region
      %611 = vsyncadd [#allocation3], 0
      %s613 = sshll.u32 [#allocation2], 4
      %s614 = int_to_ptr.vmem [resolvable:$true] %s613
      %s615 = sshll.u32 %s2, 4
      %s616 = int_to_ptr.hbm [resolvable:$true] %s615
      %618 = dma.vmem_to_hbm [thread:$0]  %s614, 16, %s616, [#allocation3]
    $region13: #{tpu_custom_call.1} parent=1 // pred_fallthru
      _
    // Predicated region
    $region14: #{tpu_custom_call.1} parent=1 // pred_check
      _
    $region15: #{tpu_custom_call.1} parent=1 // pred_check_branch
      %620 = sbr.rel (0) target = $region17
    $region16: #{tpu_custom_call.1} parent=1 // pred_region
      %622 = dma.done [#allocation3], 16
    $region17: #{tpu_custom_call.1} parent=1 // pred_fallthru
      _
    %623 = vsyncpa [#allocation3], 1

</llo_original>
